<compile_context>
chip_gen: v7x
topology: tpu7x:2x2x1
jax: 0.10.0
libtpu: 0.0.40
codegen_flags: <defaults>
</compile_context>

<pallas_src>
import jax
import jax.numpy as jnp
from jax.experimental import pallas as pl
from jax.experimental.pallas import tpu as pltpu


def gcn_kernel(x2d_ref, adj_ref, w_ref, o_ref):
    # x2d_ref: (Bt*N, Dk)   packed node features for Bt graphs (Din padded to Dk)
    # adj_ref: (Bt, N, N)   adjacency for the same Bt graphs
    # w_ref:   (Dp, Dk)     nn.Linear weight, PyTorch [out, in] layout (padded)
    # o_ref:   (Bt, N, Dp)
    Bt, N, Dp = o_ref.shape

    # Stage 1: one lane/sublane-dense matmul for ALL Bt*N rows. Contract on the
    # in_dim axis of both operands (axis 1 of x2d, axis 1 of W) -> no transpose.
    h = jax.lax.dot_general(
        x2d_ref[...], w_ref[...],
        dimension_numbers=(((1,), (1,)), ((), ())),
        preferred_element_type=jnp.float32,
    )  # (Bt*N, Dp), f32 accumulation
    # Keep the second matmul's operands in the (possibly bf16) input dtype so it
    # stays on the fast MXU path; accumulation is still f32.
    h = h.astype(adj_ref.dtype)

    # Stage 2: per-graph neighborhood aggregation adj[b] @ h[b].
    # Bt is a small static constant -> this Python loop is unrolled at trace time
    # and every op is a plain 2D MXU matmul on (8,128)-aligned tiles.
    for b in range(Bt):
        hb = h[b * N:(b + 1) * N, :]                     # static, tile-aligned slice
        ob = jnp.dot(adj_ref[b], hb, preferred_element_type=jnp.float32)
        o_ref[b] = ob.astype(o_ref.dtype)


def _round_up(x, m):
    return (x + m - 1) // m * m


def simple_gcn_forward(inputs, adj, weight, *, block_b=8, compute_dtype=None):
    """inputs: [B, N, Din], adj: [B, N, N], weight: [Dout, Din] (PyTorch layout).

    compute_dtype: set to jnp.bfloat16 on v6e/v7x to run both matmuls with bf16
    operands / f32 accumulation (output stays in the original input dtype).
    """
    B, N, Din = inputs.shape
    Dout, Din_w = weight.shape
    assert Din_w == Din and adj.shape == (B, N, N)

    out_dtype = inputs.dtype
    if compute_dtype is not None:
        inputs = inputs.astype(compute_dtype)
        adj = adj.astype(compute_dtype)
        weight = weight.astype(compute_dtype)

    # Lane-dense padding: Dout < 128 would force masked partial stores (biggest
    # measured store-side cost); Din padding keeps the MXU contraction 128-wide.
    Dk = _round_up(Din, 128)
    Dp = _round_up(Dout, 128)
    if Dk != Din:
        inputs = jnp.pad(inputs, ((0, 0), (0, 0), (0, Dk - Din)))
        weight = jnp.pad(weight, ((0, 0), (0, Dk - Din)))
    if Dp != Dout:
        weight = jnp.pad(weight, ((0, Dp - Dout), (0, 0)))

    # Pack the linear stage: every grid step sees Bt*N rows as one 2D operand.
    x2d = inputs.reshape(B * N, Dk)

    Bt = min(B, block_b)                  # graphs per grid step; B<=block_b -> grid=(1,)
    grid = (pl.cdiv(B, Bt),)

    itemsize = jnp.dtype(inputs.dtype).itemsize
    cost = pl.CostEstimate(
        flops=2 * B * N * Dk * Dp + 2 * B * N * N * Dp,
        transcendentals=0,
        bytes_accessed=(x2d.size + adj.size + weight.size) * itemsize
                       + B * N * Dp * jnp.dtype(out_dtype).itemsize,
    )

    out = pl.pallas_call(
        gcn_kernel,
        out_shape=jax.ShapeDtypeStruct((B, N, Dp), out_dtype),
        grid_spec=pltpu.PrefetchScalarGridSpec(
            num_scalar_prefetch=0,
            grid=grid,
            in_specs=[
                pl.BlockSpec((Bt * N, Dk), lambda i: (i, 0)),     # packed node feats
                pl.BlockSpec((Bt, N, N), lambda i: (i, 0, 0)),    # adjacency block
                pl.BlockSpec((Dp, Dk), lambda i: (0, 0)),         # shared weight
            ],
            out_specs=pl.BlockSpec((Bt, N, Dp), lambda i: (i, 0, 0)),
        ),
        compiler_params=pltpu.CompilerParams(
            dimension_semantics=("parallel",),   # batch-block axis; v7x megacore shards it
        ),
        cost_estimate=cost,
    )(x2d, adj, weight)

    return out[..., :Dout] if Dp != Dout else out


if __name__ == "__main__":
    # Small shapes consistent with the module: batch=2, nodes=16, in_dim=32, out_dim=32
    B, N, Din, Dout = 2, 16, 32, 32

    key = jax.random.PRNGKey(0)
    k_x, k_adj, k_w = jax.random.split(key, 3)

    x = jax.random.normal(k_x, (B, N, Din), dtype=jnp.float32)
    adj = jax.random.uniform(k_adj, (B, N, N), dtype=jnp.float32)
    # nn.Linear-style init: shape [out_dim, in_dim], uniform in +/- 1/sqrt(in_dim).
    bound = 1.0 / (Din ** 0.5)
    weight = jax.random.uniform(k_w, (Dout, Din), dtype=jnp.float32,
                                minval=-bound, maxval=bound)

    out = simple_gcn_forward(x, adj, weight)
    out = jax.block_until_ready(out)

    # Reference check in plain JAX (same math as torch.bmm(adj, fc(x))).
    ref = jnp.einsum("bnm,bmd->bnd", adj, jnp.einsum("bni,oi->bno", x, weight))
    assert out.shape == (B, N, Dout)
    assert jnp.allclose(out, ref, atol=1e-4, rtol=1e-4), "mismatch vs reference"

    print("KERNEL_OK")
</pallas_src>

<mosaic_0001>
module attributes {stable_mosaic.version = 11 : i64} {
  func.func @gcn_kernel(%arg0: i32, %arg1: memref<32x128xf32, #tpu.memory_space<vmem>>, %arg2: memref<2x16x16xf32, #tpu.memory_space<vmem>>, %arg3: memref<128x128xf32, #tpu.memory_space<vmem>>, %arg4: memref<2x16x128xf32, #tpu.memory_space<vmem>>) attributes {dimension_semantics = [#tpu.dimension_semantics<parallel>], iteration_bounds = array<i64: 1>, scalar_prefetch = 0 : i64, scratch_operands = 0 : i64, tpu.core_type = #tpu.core_type<tc>, window_params = [{transform_indices = @transform_0, window_bounds = array<i64: 32, 128>}, {transform_indices = @transform_1, window_bounds = array<i64: 2, 16, 16>}, {pipeline_mode = #tpu.pipeline_mode<synchronous>, transform_indices = @transform_2, window_bounds = array<i64: 128, 128>}, {transform_indices = @transform_3, window_bounds = array<i64: 2, 16, 128>}]} {
    %c0 = arith.constant 0 : index
    %c0_0 = arith.constant 0 : index
    %0 = vector.load %arg1[%c0, %c0_0] : memref<32x128xf32, #tpu.memory_space<vmem>>, vector<32x128xf32>
    %c0_1 = arith.constant 0 : index
    %c0_2 = arith.constant 0 : index
    %1 = vector.load %arg3[%c0_1, %c0_2] : memref<128x128xf32, #tpu.memory_space<vmem>>, vector<128x128xf32>
    %cst = arith.constant dense<0.000000e+00> : vector<32x128xf32>
    %2 = tpu.matmul %0, %1, %cst {dimension_numbers = #tpu.dot_dimension_numbers<[1], [1], [0], [0], [0, 0, 1, 0], [], []>} : vector<32x128xf32>, vector<128x128xf32>, vector<32x128xf32> -> vector<32x128xf32>
    %3 = vector.extract_strided_slice %2 {offsets = [0, 0], sizes = [16, 128], strides = [1, 1]} : vector<32x128xf32> to vector<16x128xf32>
    %c0_3 = arith.constant 0 : index
    %c0_4 = arith.constant 0 : index
    %c0_5 = arith.constant 0 : index
    %4 = vector.load %arg2[%c0_3, %c0_4, %c0_5] : memref<2x16x16xf32, #tpu.memory_space<vmem>>, vector<1x16x16xf32>
    %5 = vector.shape_cast %4 : vector<1x16x16xf32> to vector<16x16xf32>
    %cst_6 = arith.constant dense<0.000000e+00> : vector<16x128xf32>
    %6 = tpu.matmul %5, %3, %cst_6 {dimension_numbers = #tpu.dot_dimension_numbers<[1], [0], [0], [1], [0, 0, 1, 1], [], []>} : vector<16x16xf32>, vector<16x128xf32>, vector<16x128xf32> -> vector<16x128xf32>
    %c0_7 = arith.constant 0 : index
    %c0_8 = arith.constant 0 : index
    %c0_9 = arith.constant 0 : index
    %7 = vector.load %arg4[%c0_7, %c0_8, %c0_9] : memref<2x16x128xf32, #tpu.memory_space<vmem>>, vector<1x16x128xf32>
    %8 = vector.shape_cast %7 : vector<1x16x128xf32> to vector<16x128xf32>
    %9 = vector.shape_cast %6 : vector<16x128xf32> to vector<1x16x128xf32>
    tpu.vector_store %arg4[%c0_7, %c0_8, %c0_9], %9 {strides = array<i32>} : memref<2x16x128xf32, #tpu.memory_space<vmem>>, vector<1x16x128xf32>,
    %10 = vector.extract_strided_slice %2 {offsets = [16, 0], sizes = [16, 128], strides = [1, 1]} : vector<32x128xf32> to vector<16x128xf32>
    %c1 = arith.constant 1 : index
    %c0_10 = arith.constant 0 : index
    %c0_11 = arith.constant 0 : index
    %11 = vector.load %arg2[%c1, %c0_10, %c0_11] : memref<2x16x16xf32, #tpu.memory_space<vmem>>, vector<1x16x16xf32>
    %12 = vector.shape_cast %11 : vector<1x16x16xf32> to vector<16x16xf32>
    %cst_12 = arith.constant dense<0.000000e+00> : vector<16x128xf32>
    %13 = tpu.matmul %12, %10, %cst_12 {dimension_numbers = #tpu.dot_dimension_numbers<[1], [0], [0], [1], [0, 0, 1, 1], [], []>} : vector<16x16xf32>, vector<16x128xf32>, vector<16x128xf32> -> vector<16x128xf32>
    %c1_13 = arith.constant 1 : index
    %c0_14 = arith.constant 0 : index
    %c0_15 = arith.constant 0 : index
    %14 = vector.load %arg4[%c1_13, %c0_14, %c0_15] : memref<2x16x128xf32, #tpu.memory_space<vmem>>, vector<1x16x128xf32>
    %15 = vector.shape_cast %14 : vector<1x16x128xf32> to vector<16x128xf32>
    %16 = vector.shape_cast %13 : vector<16x128xf32> to vector<1x16x128xf32>
    tpu.vector_store %arg4[%c1_13, %c0_14, %c0_15], %16 {strides = array<i32>} : memref<2x16x128xf32, #tpu.memory_space<vmem>>, vector<1x16x128xf32>,
    return
  }
  func.func @transform_0(%arg0: i32) -> (i32, i32) {
    %c0_i32 = arith.constant 0 : i32
    %c0_i32_0 = arith.constant 0 : i32
    return %arg0, %c0_i32 : i32, i32
  }
  func.func @transform_1(%arg0: i32) -> (i32, i32, i32) {
    %c0_i32 = arith.constant 0 : i32
    %c0_i32_0 = arith.constant 0 : i32
    %c0_i32_1 = arith.constant 0 : i32
    return %arg0, %c0_i32, %c0_i32_0 : i32, i32, i32
  }
  func.func @transform_2(%arg0: i32) -> (i32, i32) {
    %c0_i32 = arith.constant 0 : i32
    %c0_i32_0 = arith.constant 0 : i32
    %c0_i32_1 = arith.constant 0 : i32
    return %c0_i32, %c0_i32_0 : i32, i32
  }
  func.func @transform_3(%arg0: i32) -> (i32, i32, i32) {
    %c0_i32 = arith.constant 0 : i32
    %c0_i32_0 = arith.constant 0 : i32
    %c0_i32_1 = arith.constant 0 : i32
    return %arg0, %c0_i32, %c0_i32_0 : i32, i32, i32
  }
}

</mosaic_0001>

<llo_original>
// kernel: tpu_custom_call.1
$region0: #{tpu_custom_call.1}
  #allocation0 [shape = 'u32[]', space=smem, size = 0x4, offset = 0x4, fixed_abs, tag = 'smem constant byte address 0x4 - core index']
  #allocation1 [shape = 'u32[144,128]{1,0:T(1,128)}', space=vmem, size = 0x12000, scoped, tag = 'internal scratch']
  %s0 = inlined_call_operand.hbm [shape: f32[32,128], index: 0, kind: input, shape index: {}]
  %s1 = inlined_call_operand.hbm [shape: f32[2,16,16], index: 1, kind: input, shape index: {}]
  %s2 = inlined_call_operand.hbm [shape: f32[128,128], index: 2, kind: input, shape index: {}]
  %s3 = inlined_call_operand.hbm [shape: f32[2,16,128], index: 3, kind: output, shape index: {}]
  %s4 = sld [smem:[#allocation0]]
  $region34: #{tpu_custom_call.1} parent=0
    _
  %s6 = ssub.s32 1, %s4
  %s7 = scalar_select 0, %s6, %s4
  $region1: #{tpu_custom_call.1} parent=0
    #allocation2 [shape = 'u8[16384]{0}', space=vmem, size = 0x4000, scoped, tag = 'input window, operand 0, single buffered']
    #allocation3 [shape = 's32[1]{0}', space=sflag, size = 0x4, scoped, tag = 'scoped memory for tpu_custom_call.1']
    #allocation4 [shape = 's32[1]{0}', space=sflag, size = 0x4, scoped, tag = 'scoped memory for tpu_custom_call.1']
    #allocation5 [shape = 'u8[16384]{0}', space=vmem, size = 0x4000, scoped, tag = 'input window, operand 1, single buffered']
    #allocation6 [shape = 's32[1]{0}', space=sflag, size = 0x4, scoped, tag = 'scoped memory for tpu_custom_call.1']
    #allocation7 [shape = 'u8[65536]{0}', space=vmem, size = 0x10000, scoped, tag = 'input window, operand 2, single buffered']
    #allocation8 [shape = 'u8[16384]{0}', space=vmem, size = 0x4000, scoped, tag = 'output window, operand 0, single buffered']
    %8 = vsyncpa [#allocation3], 0
    %9 = vsyncpa [#allocation6], 0
    %10 = vsyncpa [#allocation4], 0
    // Predicated region
    $region2: #{tpu_custom_call.1} parent=1 // pred_check
      _
    $region3: #{tpu_custom_call.1} parent=1 // pred_check_branch
      %12 = sbr.rel (0) target = $region5
    $region4: #{tpu_custom_call.1} parent=1 // pred_region
      %s14 = ssub.s32 512, 512
      %15 = vsyncadd [#allocation3], %s14
      %s16 = sshll.u32 [#allocation2], 4
      %s17 = int_to_ptr.vmem [resolvable:$true] %s16
      %22 = dma.hbm_to_vmem [thread:$0]  %s0, 512, %s17, [#allocation3], 128, 128, 8
    $region5: #{tpu_custom_call.1} parent=1 // pred_fallthru
      _
    // Predicated region
    $region6: #{tpu_custom_call.1} parent=1 // pred_check
      _
    $region7: #{tpu_custom_call.1} parent=1 // pred_check_branch
      %24 = sbr.rel (0) target = $region9
    $region8: #{tpu_custom_call.1} parent=1 // pred_region
      %s26 = ssub.s32 512, 512
      %27 = vsyncadd [#allocation6], %s26
      %s28 = sshll.u32 [#allocation5], 4
      %s29 = int_to_ptr.vmem [resolvable:$true] %s28
      %34 = dma.hbm_to_vmem [thread:$0]  %s1, 512, %s29, [#allocation6], 128, 128, 8
    $region9: #{tpu_custom_call.1} parent=1 // pred_fallthru
      _
    // Predicated region
    $region10: #{tpu_custom_call.1} parent=1 // pred_check
      _
    $region11: #{tpu_custom_call.1} parent=1 // pred_check_branch
      %36 = sbr.rel (0) target = $region13
    $region12: #{tpu_custom_call.1} parent=1 // pred_region
      %s38 = ssub.s32 2048, 2048
      %39 = vsyncadd [#allocation6], %s38
      %s40 = sshll.u32 [#allocation7], 4
      %s41 = int_to_ptr.vmem [resolvable:$true] %s40
      %46 = dma.hbm_to_vmem [thread:$0]  %s2, 2048, %s41, [#allocation6], 128, 128, 8
    $region13: #{tpu_custom_call.1} parent=1 // pred_fallthru
      _
    // Predicated region
    $region14: #{tpu_custom_call.1} parent=1 // pred_check
      _
    $region15: #{tpu_custom_call.1} parent=1 // pred_check_branch
      %48 = sbr.rel (0) target = $region17
    $region16: #{tpu_custom_call.1} parent=1 // pred_region
      %49 = dma.done [#allocation3], 512
    $region17: #{tpu_custom_call.1} parent=1 // pred_fallthru
      _
    // Predicated region
    $region18: #{tpu_custom_call.1} parent=1 // pred_check
      _
    $region19: #{tpu_custom_call.1} parent=1 // pred_check_branch
      %51 = sbr.rel (0) target = $region21
    $region20: #{tpu_custom_call.1} parent=1 // pred_region
      %52 = dma.done [#allocation6], 512
    $region21: #{tpu_custom_call.1} parent=1 // pred_fallthru
      _
    // Predicated region
    $region22: #{tpu_custom_call.1} parent=1 // pred_check
      _
    $region23: #{tpu_custom_call.1} parent=1 // pred_check_branch
      %54 = sbr.rel (0) target = $region25
    $region24: #{tpu_custom_call.1} parent=1 // pred_region
      %55 = dma.done [#allocation6], 2048
    $region25: #{tpu_custom_call.1} parent=1 // pred_fallthru
      _
    %v56 = vld [vmem:[#allocation2] sm:$0xff]
    %v57 = vld [vmem:[#allocation2 + $0x8] sm:$0xff]
    %v58 = vld [vmem:[#allocation2 + $0x10] sm:$0xff]
    %v59 = vld [vmem:[#allocation2 + $0x18] sm:$0xff]
    %v60 = vld [vmem:[#allocation7] sm:$0xff]
    %v61 = vld [vmem:[#allocation7 + $0x8] sm:$0xff]
    %v62 = vld [vmem:[#allocation7 + $0x10] sm:$0xff]
    %v63 = vld [vmem:[#allocation7 + $0x18] sm:$0xff]
    %v64 = vld [vmem:[#allocation7 + $0x20] sm:$0xff]
    %v65 = vld [vmem:[#allocation7 + $0x28] sm:$0xff]
    %v66 = vld [vmem:[#allocation7 + $0x30] sm:$0xff]
    %v67 = vld [vmem:[#allocation7 + $0x38] sm:$0xff]
    %v68 = vld [vmem:[#allocation7 + $0x40] sm:$0xff]
    %v69 = vld [vmem:[#allocation7 + $0x48] sm:$0xff]
    %v70 = vld [vmem:[#allocation7 + $0x50] sm:$0xff]
    %v71 = vld [vmem:[#allocation7 + $0x58] sm:$0xff]
    %v72 = vld [vmem:[#allocation7 + $0x60] sm:$0xff]
    %v73 = vld [vmem:[#allocation7 + $0x68] sm:$0xff]
    %v74 = vld [vmem:[#allocation7 + $0x70] sm:$0xff]
    %v75 = vld [vmem:[#allocation7 + $0x78] sm:$0xff]
    %76 = vmatprep.subr.mxu0 0.0
    %77 = vmatpush1.xpose.msra.mxu0 %v60
    %78 = vmatprep.subr.mxu0 0.0
    %79 = vmatpush1.xpose.msra.mxu0 %v61
    %80 = vmatprep.subr.mxu0 0.0
    %81 = vmatpush1.xpose.msra.mxu0 %v62
    %82 = vmatprep.subr.mxu0 0.0
    %83 = vmatpush1.xpose.msra.mxu0 %v63
    %84 = vmatprep.subr.mxu0 0.0
    %85 = vmatpush1.xpose.msra.mxu0 %v64
    %86 = vmatprep.subr.mxu0 0.0
    %87 = vmatpush1.xpose.msra.mxu0 %v65
    %88 = vmatprep.subr.mxu0 0.0
    %89 = vmatpush1.xpose.msra.mxu0 %v66
    %90 = vmatprep.subr.mxu0 0.0
    %91 = vmatpush1.xpose.msra.mxu0 %v67
    %92 = vmatprep.subr.mxu0 0.0
    %93 = vmatpush1.xpose.msra.mxu0 %v68
    %94 = vmatprep.subr.mxu0 0.0
    %95 = vmatpush1.xpose.msra.mxu0 %v69
    %96 = vmatprep.subr.mxu0 0.0
    %97 = vmatpush1.xpose.msra.mxu0 %v70
    %98 = vmatprep.subr.mxu0 0.0
    %99 = vmatpush1.xpose.msra.mxu0 %v71
    %100 = vmatprep.subr.mxu0 0.0
    %101 = vmatpush1.xpose.msra.mxu0 %v72
    %102 = vmatprep.subr.mxu0 0.0
    %103 = vmatpush1.xpose.msra.mxu0 %v73
    %104 = vmatprep.subr.mxu0 0.0
    %105 = vmatpush1.xpose.msra.mxu0 %v74
    %106 = vmatprep.subr.mxu0 0.0
    %107 = vmatpush1.xpose.msra.mxu0 %v75
    %108 = vmatprep.subr.mxu0 0.0
    %109 = vmatpush1.xpose.msra.mxu0 0.0
    %110 = vmatprep.subr.mxu0 0.0
    %111 = vmatpush1.xpose.msra.mxu0 0.0
    %112 = vmatprep.subr.mxu0 0.0
    %113 = vmatpush1.xpose.msra.mxu0 0.0
    %114 = vmatprep.subr.mxu0 0.0
    %115 = vmatpush1.xpose.msra.mxu0 0.0
    %116 = vmatprep.subr.mxu0 0.0
    %117 = vmatpush1.xpose.msra.mxu0 0.0
    %118 = vmatprep.subr.mxu0 0.0
    %119 = vmatpush1.xpose.msra.mxu0 0.0
    %120 = vmatprep.subr.mxu0 0.0
    %121 = vmatpush1.xpose.msra.mxu0 0.0
    %122 = vmatprep.subr.mxu0 0.0
    %123 = vmatpush1.xpose.msra.mxu0 0.0
    %124 = vmatprep.subr.mxu0 0.0
    %125 = vmatpush1.xpose.msra.mxu0 0.0
    %126 = vmatprep.subr.mxu0 0.0
    %127 = vmatpush1.xpose.msra.mxu0 0.0
    %128 = vmatprep.subr.mxu0 0.0
    %129 = vmatpush1.xpose.msra.mxu0 0.0
    %130 = vmatprep.subr.mxu0 0.0
    %131 = vmatpush1.xpose.msra.mxu0 0.0
    %132 = vmatprep.subr.mxu0 0.0
    %133 = vmatpush1.xpose.msra.mxu0 0.0
    %134 = vmatprep.subr.mxu0 0.0
    %135 = vmatpush1.xpose.msra.mxu0 0.0
    %136 = vmatprep.subr.mxu0 0.0
    %137 = vmatpush1.xpose.msra.mxu0 0.0
    %138 = vmatprep.subr.mxu0 0.0
    %139 = vmatpush1.xpose.msra.mxu0 0.0
    %140 = vmatprep.mubr.f32.mxu0 0.0
    %141 = vmatmul.mubr.f32.gmra.mrb[0].mxu0 %v56
    %v142 = vpop.f32.mrb[0].mxu0
    %v143 = vadd.f32 0.0, %v142
    %v144 = vpop.f32.mrb[0].mxu0
    %145 = vmatprep.mubr.f32.mxu0 0.0
    %146 = vmatmul.mubr.f32.gmra.mrb[0].mxu0 %v57
    %v147 = vpop.f32.mrb[0].mxu0
    %v148 = vadd.f32 0.0, %v147
    %v149 = vpop.f32.mrb[0].mxu0
    %150 = vmatprep.mubr.f32.mxu0 0.0
    %151 = vmatmul.mubr.f32.gmra.mrb[0].mxu0 %v58
    %v152 = vpop.f32.mrb[0].mxu0
    %v153 = vadd.f32 0.0, %v152
    %v154 = vpop.f32.mrb[0].mxu0
    %155 = vmatprep.mubr.f32.mxu0 0.0
    %156 = vmatmul.mubr.f32.gmra.mrb[0].mxu0 %v59
    %v157 = vpop.f32.mrb[0].mxu0
    %v158 = vadd.f32 0.0, %v157
    %v159 = vpop.f32.mrb[0].mxu0
    %160 = vdwg.mxu0
    %v161 = vld [vmem:[#allocation5] sm:$0xff]
    %v162 = vld [vmem:[#allocation5 + $0x8] sm:$0xff]
    %vm163 = vcmask 130048
    %v165 = vsel %vm163, %v161, 0
    %v168 = vsel %vm163, %v162, 0
    %170 = vmatprep.subr.mxu0 0.0
    %171 = vmatpush1.msra.mxu0 %v143
    %172 = vmatprep.subr.mxu0 0.0
    %173 = vmatpush1.msra.mxu0 %v148
    %174 = vmatprep.subr.mxu0 0.0
    %175 = vmatpush1.msra.mxu0 0.0
    %176 = vmatprep.subr.mxu0 0.0
    %177 = vmatpush1.msra.mxu0 0.0
    %178 = vmatprep.subr.mxu0 0.0
    %179 = vmatpush1.msra.mxu0 0.0
    %180 = vmatprep.subr.mxu0 0.0
    %181 = vmatpush1.msra.mxu0 0.0
    %182 = vmatprep.subr.mxu0 0.0
    %183 = vmatpush1.msra.mxu0 0.0
    %184 = vmatprep.subr.mxu0 0.0
    %185 = vmatpush1.msra.mxu0 0.0
    %186 = vmatprep.subr.mxu0 0.0
    %187 = vmatpush1.msra.mxu0 0.0
    %188 = vmatprep.subr.mxu0 0.0
    %189 = vmatpush1.msra.mxu0 0.0
    %190 = vmatprep.subr.mxu0 0.0
    %191 = vmatpush1.msra.mxu0 0.0
    %192 = vmatprep.subr.mxu0 0.0
    %193 = vmatpush1.msra.mxu0 0.0
    %194 = vmatprep.subr.mxu0 0.0
    %195 = vmatpush1.msra.mxu0 0.0
    %196 = vmatprep.subr.mxu0 0.0
    %197 = vmatpush1.msra.mxu0 0.0
    %198 = vmatprep.subr.mxu0 0.0
    %199 = vmatpush1.msra.mxu0 0.0
    %200 = vmatprep.subr.mxu0 0.0
    %201 = vmatpush1.msra.mxu0 0.0
    %202 = vmatprep.subr.mxu0 0.0
    %203 = vmatpush1.msra.mxu0 0.0
    %204 = vmatprep.subr.mxu0 0.0
    %205 = vmatpush1.msra.mxu0 0.0
    %206 = vmatprep.subr.mxu0 0.0
    %207 = vmatpush1.msra.mxu0 0.0
    %208 = vmatprep.subr.mxu0 0.0
    %209 = vmatpush1.msra.mxu0 0.0
    %210 = vmatprep.subr.mxu0 0.0
    %211 = vmatpush1.msra.mxu0 0.0
    %212 = vmatprep.subr.mxu0 0.0
    %213 = vmatpush1.msra.mxu0 0.0
    %214 = vmatprep.subr.mxu0 0.0
    %215 = vmatpush1.msra.mxu0 0.0
    %216 = vmatprep.subr.mxu0 0.0
    %217 = vmatpush1.msra.mxu0 0.0
    %218 = vmatprep.subr.mxu0 0.0
    %219 = vmatpush1.msra.mxu0 0.0
    %220 = vmatprep.subr.mxu0 0.0
    %221 = vmatpush1.msra.mxu0 0.0
    %222 = vmatprep.subr.mxu0 0.0
    %223 = vmatpush1.msra.mxu0 0.0
    %224 = vmatprep.subr.mxu0 0.0
    %225 = vmatpush1.msra.mxu0 0.0
    %226 = vmatprep.subr.mxu0 0.0
    %227 = vmatpush1.msra.mxu0 0.0
    %228 = vmatprep.subr.mxu0 0.0
    %229 = vmatpush1.msra.mxu0 0.0
    %230 = vmatprep.subr.mxu0 0.0
    %231 = vmatpush1.msra.mxu0 0.0
    %232 = vmatprep.subr.mxu0 0.0
    %233 = vmatpush1.msra.mxu0 0.0
    %234 = vmatprep.mubr.f32.mxu0 0.0
    %235 = vmatmul.mubr.f32.gmra.mrb[0].mxu0 %v165
    %v236 = vpop.f32.mrb[0].mxu0
    %v237 = vadd.f32 0.0, %v236
    %v238 = vpop.f32.mrb[0].mxu0
    %239 = vmatprep.mubr.f32.mxu0 0.0
    %240 = vmatmul.mubr.f32.gmra.mrb[0].mxu0 %v168
    %v241 = vpop.f32.mrb[0].mxu0
    %v242 = vadd.f32 0.0, %v241
    %v243 = vpop.f32.mrb[0].mxu0
    %244 = vdwg.mxu0
    %245 = vst [vmem:[#allocation8] sm:$0xff] %v237
    %246 = vst [vmem:[#allocation8 + $0x8] sm:$0xff] %v242
    %s247 = scalar_lea.vmem [#allocation5], 16
    %v248 = vld [vmem:[%s247] sm:$0xff]
    %v249 = vld [vmem:[%s247 + $0x8] sm:$0xff]
    %v251 = vsel %vm163, %v248, 0
    %v254 = vsel %vm163, %v249, 0
    %256 = vmatprep.subr.mxu0 0.0
    %257 = vmatpush1.msra.mxu0 %v153
    %258 = vmatprep.subr.mxu0 0.0
    %259 = vmatpush1.msra.mxu0 %v158
    %260 = vmatprep.subr.mxu0 0.0
    %261 = vmatpush1.msra.mxu0 0.0
    %262 = vmatprep.subr.mxu0 0.0
    %263 = vmatpush1.msra.mxu0 0.0
    %264 = vmatprep.subr.mxu0 0.0
    %265 = vmatpush1.msra.mxu0 0.0
    %266 = vmatprep.subr.mxu0 0.0
    %267 = vmatpush1.msra.mxu0 0.0
    %268 = vmatprep.subr.mxu0 0.0
    %269 = vmatpush1.msra.mxu0 0.0
    %270 = vmatprep.subr.mxu0 0.0
    %271 = vmatpush1.msra.mxu0 0.0
    %272 = vmatprep.subr.mxu0 0.0
    %273 = vmatpush1.msra.mxu0 0.0
    %274 = vmatprep.subr.mxu0 0.0
    %275 = vmatpush1.msra.mxu0 0.0
    %276 = vmatprep.subr.mxu0 0.0
    %277 = vmatpush1.msra.mxu0 0.0
    %278 = vmatprep.subr.mxu0 0.0
    %279 = vmatpush1.msra.mxu0 0.0
    %280 = vmatprep.subr.mxu0 0.0
    %281 = vmatpush1.msra.mxu0 0.0
    %282 = vmatprep.subr.mxu0 0.0
    %283 = vmatpush1.msra.mxu0 0.0
    %284 = vmatprep.subr.mxu0 0.0
    %285 = vmatpush1.msra.mxu0 0.0
    %286 = vmatprep.subr.mxu0 0.0
    %287 = vmatpush1.msra.mxu0 0.0
    %288 = vmatprep.subr.mxu0 0.0
    %289 = vmatpush1.msra.mxu0 0.0
    %290 = vmatprep.subr.mxu0 0.0
    %291 = vmatpush1.msra.mxu0 0.0
    %292 = vmatprep.subr.mxu0 0.0
    %293 = vmatpush1.msra.mxu0 0.0
    %294 = vmatprep.subr.mxu0 0.0
    %295 = vmatpush1.msra.mxu0 0.0
    %296 = vmatprep.subr.mxu0 0.0
    %297 = vmatpush1.msra.mxu0 0.0
    %298 = vmatprep.subr.mxu0 0.0
    %299 = vmatpush1.msra.mxu0 0.0
    %300 = vmatprep.subr.mxu0 0.0
    %301 = vmatpush1.msra.mxu0 0.0
    %302 = vmatprep.subr.mxu0 0.0
    %303 = vmatpush1.msra.mxu0 0.0
    %304 = vmatprep.subr.mxu0 0.0
    %305 = vmatpush1.msra.mxu0 0.0
    %306 = vmatprep.subr.mxu0 0.0
    %307 = vmatpush1.msra.mxu0 0.0
    %308 = vmatprep.subr.mxu0 0.0
    %309 = vmatpush1.msra.mxu0 0.0
    %310 = vmatprep.subr.mxu0 0.0
    %311 = vmatpush1.msra.mxu0 0.0
    %312 = vmatprep.subr.mxu0 0.0
    %313 = vmatpush1.msra.mxu0 0.0
    %314 = vmatprep.subr.mxu0 0.0
    %315 = vmatpush1.msra.mxu0 0.0
    %316 = vmatprep.subr.mxu0 0.0
    %317 = vmatpush1.msra.mxu0 0.0
    %318 = vmatprep.subr.mxu0 0.0
    %319 = vmatpush1.msra.mxu0 0.0
    %320 = vmatprep.mubr.f32.mxu0 0.0
    %321 = vmatmul.mubr.f32.gmra.mrb[0].mxu0 %v251
    %v322 = vpop.f32.mrb[0].mxu0
    %v323 = vadd.f32 0.0, %v322
    %v324 = vpop.f32.mrb[0].mxu0
    %325 = vmatprep.mubr.f32.mxu0 0.0
    %326 = vmatmul.mubr.f32.gmra.mrb[0].mxu0 %v254
    %v327 = vpop.f32.mrb[0].mxu0
    %v328 = vadd.f32 0.0, %v327
    %v329 = vpop.f32.mrb[0].mxu0
    %330 = vdwg.mxu0
    %s331 = scalar_lea.vmem [#allocation8], 16
    %332 = vst [vmem:[%s331] sm:$0xff] %v323
    %333 = vst [vmem:[%s331 + $0x8] sm:$0xff] %v328
    // Predicated region
    $region26: #{tpu_custom_call.1} parent=1 // pred_check
      _
    $region27: #{tpu_custom_call.1} parent=1 // pred_check_branch
      %335 = sbr.rel (0) target = $region29
    $region28: #{tpu_custom_call.1} parent=1 // pred_region
      %s337 = ssub.s32 512, 512
      %338 = vsyncadd [#allocation4], %s337
      %s339 = sshll.u32 [#allocation8], 4
      %s340 = int_to_ptr.vmem [resolvable:$true] %s339
      %345 = dma.vmem_to_hbm [thread:$0]  %s340, 512, %s3, [#allocation4], 128, 128, 8
    $region29: #{tpu_custom_call.1} parent=1 // pred_fallthru
      _
    // Predicated region
    $region30: #{tpu_custom_call.1} parent=1 // pred_check
      _
    $region31: #{tpu_custom_call.1} parent=1 // pred_check_branch
      %347 = sbr.rel (0) target = $region33
    $region32: #{tpu_custom_call.1} parent=1 // pred_region
      %348 = dma.done [#allocation4], 512
    $region33: #{tpu_custom_call.1} parent=1 // pred_fallthru
      _
    %349 = vsyncpa [#allocation3], 1
    %350 = vsyncpa [#allocation6], 1
    %351 = vsyncpa [#allocation4], 1

</llo_original>
